<compile_context>
chip_gen: v7x
topology: tpu7x:2x2x1
jax: 0.10.0
libtpu: 0.0.40
codegen_flags: <defaults>
</compile_context>

<pallas_src>
import jax
import jax.numpy as jnp
from jax.experimental import pallas as pl
from jax.experimental.pallas import tpu as pltpu


def _round_up(n: int, m: int) -> int:
    return (n + m - 1) // m * m


def _cdiv(a: int, b: int) -> int:
    return (a + b - 1) // b


def _vmem_limit_bytes() -> int:
    """Generation-aware VMEM budget: ~48 MiB on v7x (64 MiB part), ~96 MiB on v5e/v6e."""
    try:
        cap = int(pltpu.get_tpu_info().vmem_capacity_bytes)
    except Exception:
        cap = 64 * 1024 * 1024  # conservative fallback (v7x-sized)
    return min(cap * 3 // 4, 100 * 1024 * 1024)


def _resident_spec(block_shape):
    """Constant-index (VMEM-resident) block; single-buffered where the API allows."""
    index_map = lambda i: (0,) * len(block_shape)
    try:
        return pl.BlockSpec(block_shape, index_map, pipeline_mode=pl.Buffered(1))
    except Exception:  # older JAX without pipeline_mode / Buffered
        return pl.BlockSpec(block_shape, index_map)


def _hist_attn_kernel(h_ref, c_ref, wh_ref, wc_ref, biasv_ref, vb_ref, out_ref):
    # Single f32 c block reused for both the GEMM operand and the final store.
    c32 = c_ref[...]                                                   # (TB, H) f32

    # W_h(h) + W_c(c): two MXU GEMMs against resident bf16 (in, out) weights,
    # f32 accumulation; biasv row 0 holds (b_h + b_c).
    z = (jnp.dot(h_ref[...].astype(jnp.bfloat16), wh_ref[...],
                 preferred_element_type=jnp.float32)
         + jnp.dot(c32.astype(jnp.bfloat16), wc_ref[...],
                   preferred_element_type=jnp.float32)
         + biasv_ref[0:1, :])                                          # (TB, H)

    t = jnp.tanh(z)                                                    # EUP

    # v-projection as VPU multiply + lane reduction (biasv row 1 holds v).
    score = jnp.sum(t * biasv_ref[1:2, :], axis=-1, keepdims=True) + vb_ref[0, 0]

    # softmax over the unsqueezed length-1 seq axis: exp(s - s) == 1.0 exactly,
    # so no reciprocal / normalization is needed.
    attn = jnp.exp(score - score)                                      # (TB, 1)

    # context = sum over the size-1 seq axis of attn * c_t
    out_ref[...] = (attn * c32).astype(out_ref.dtype)


def prepare_params(params, *, compute_dtype=jnp.bfloat16):
    """One-time packing at parameter-load time (NOT per forward call).

    W_h / W_c are transposed once to (in, out) layout so the kernel's GEMMs consume
    MXU-native (K, N) tiles with no per-call transpose. The two linear biases are
    pre-added and stacked with v into a single (2, H) resident operand.
    """
    H = params["W_h_w"].shape[0]
    return {
        "w_h": params["W_h_w"].T.astype(compute_dtype),                 # (H, H) (in, out)
        "w_c": params["W_c_w"].T.astype(compute_dtype),                 # (H, H) (in, out)
        "biasv": jnp.stack(
            [(params["W_h_b"] + params["W_c_b"]).astype(jnp.float32),   # row 0: b_h + b_c
             params["v_w"].reshape(H).astype(jnp.float32)],             # row 1: v
            axis=0),                                                     # (2, H)
        "v_b": params["v_b"].astype(jnp.float32).reshape(1, 1),         # SMEM scalar
    }


def historical_attention(h_t, c_t, prepared, *, block_b=2048,
                         fold_identity_softmax=True):
    """h_t, c_t: (B, H) float32. Returns the context vector, (B, H) float32.

    fold_identity_softmax=True (production default) exploits that softmax over the
    length-1 unsqueezed axis is identically 1.0, so the context is bitwise c_t and
    no kernel work is needed. Set False to run the faithful compute kernel.
    """
    B, H = h_t.shape

    if fold_identity_softmax:
        return c_t.astype(jnp.float32)

    vmem_limit = _vmem_limit_bytes()

    # ---- batch-tile selection ------------------------------------------------
    bb_target = max(8, _round_up(min(block_b, B), 8))

    # Cap the tile so streamed (h, c, out) double-buffered tiles + resident weights
    # stay comfortably inside the VMEM budget.
    weight_bytes = 2 * (H * H * 2) + 2 * H * 4            # bf16 W_h^T, W_c^T + (2,H) f32
    stream_bytes_per_row = 3 * H * 4                       # h + c + out, f32
    budget = int(vmem_limit * 0.7) - weight_bytes
    if budget > 0:
        max_bb = max(8, (budget // (2 * stream_bytes_per_row)) // 8 * 8)
        bb_target = min(bb_target, max_bb)
    # TODO(synk): if the resident weights alone exceed VMEM (budget <= 0; H ~> 2.4k on
    # v7x's 64 MiB, ~4-5k on v5e/v6e), add a trailing "arbitrary" K grid axis that
    # streams (tk, H) weight tiles into an f32 VMEM accumulator (pl.when init/finalize).

    # Balanced tiling: minimize padding, and keep >= 2 grid steps when the batch
    # allows it so dimension_semantics=("parallel",) can feed both v7x TensorCores.
    n_tiles = max(_cdiv(B, bb_target), 2 if B > 8 else 1)
    bb = max(8, _round_up(_cdiv(B, n_tiles), 8))
    Bp = _round_up(B, bb)

    if Bp != B:
        pad = ((0, Bp - B), (0, 0))
        h_t = jnp.pad(h_t, pad)
        c_t = jnp.pad(c_t, pad)

    out = pl.pallas_call(
        _hist_attn_kernel,
        out_shape=jax.ShapeDtypeStruct((Bp, H), jnp.float32),
        grid=(Bp // bb,),
        in_specs=[
            pl.BlockSpec((bb, H), lambda i: (i, 0)),            # h_t (f32)
            pl.BlockSpec((bb, H), lambda i: (i, 0)),            # c_t (f32, GEMM + output)
            _resident_spec((H, H)),                             # W_h^T bf16 (resident)
            _resident_spec((H, H)),                             # W_c^T bf16 (resident)
            _resident_spec((2, H)),                             # [b_h + b_c ; v] f32
            pl.BlockSpec(memory_space=pltpu.MemorySpace.SMEM),  # v bias scalar
        ],
        out_specs=pl.BlockSpec((bb, H), lambda i: (i, 0)),
        compiler_params=pltpu.CompilerParams(
            dimension_semantics=("parallel",),        # shard batch tiles across TCs
            vmem_limit_bytes=vmem_limit,              # 48 MiB on v7x, 96 MiB on v5e/v6e
        ),
    )(h_t, c_t, prepared["w_h"], prepared["w_c"], prepared["biasv"], prepared["v_b"])

    return out[:B]


def init_params(key, hidden_dim):
    """Deterministic init mimicking nn.Linear's U(-1/sqrt(in), 1/sqrt(in))."""
    ks = jax.random.split(key, 6)
    bound = 1.0 / jnp.sqrt(hidden_dim)
    u = lambda k, shape: jax.random.uniform(k, shape, jnp.float32, -bound, bound)
    return {
        "W_h_w": u(ks[0], (hidden_dim, hidden_dim)),  # (out, in) like PyTorch
        "W_h_b": u(ks[1], (hidden_dim,)),
        "W_c_w": u(ks[2], (hidden_dim, hidden_dim)),
        "W_c_b": u(ks[3], (hidden_dim,)),
        "v_w":   u(ks[4], (1, hidden_dim)),
        "v_b":   u(ks[5], (1,)),
    }


def reference(h_t, c_t, p):
    """Pure-JAX reference mirroring the PyTorch forward exactly."""
    h = h_t[:, None, :]                                          # (B, 1, H)
    c = c_t[:, None, :]                                          # (B, 1, H)
    wh = h @ p["W_h_w"].T + p["W_h_b"]
    wc = c @ p["W_c_w"].T + p["W_c_b"]
    score = jnp.tanh(wh + wc) @ p["v_w"].T + p["v_b"]            # (B, 1, 1)
    attn = jax.nn.softmax(score, axis=1)
    return jnp.sum(attn * c, axis=1)                             # (B, H)


if __name__ == "__main__":
    key = jax.random.PRNGKey(0)
    k_p, k_h, k_c = jax.random.split(key, 3)

    # Small demo: H = 128 (lane-dense stores), B = 13 (exercises padding and the
    # two-step grid so both v7x TensorCores get a tile).
    B, H = 13, 128
    params = init_params(k_p, H)
    prepared = prepare_params(params)

    h_t = jax.random.normal(k_h, (B, H), jnp.float32)
    c_t = jax.random.normal(k_c, (B, H), jnp.float32)

    # Faithful Pallas compute path.
    out = historical_attention(h_t, c_t, prepared, fold_identity_softmax=False)
    out = jax.block_until_ready(out)

    ref = reference(h_t, c_t, params)
    assert out.shape == (B, H)
    assert jnp.allclose(out, ref, atol=1e-5, rtol=1e-5), "mismatch vs reference"

    # Production default: the size-1 softmax makes the context exactly c_t.
    fast = historical_attention(h_t, c_t, prepared)
    fast = jax.block_until_ready(fast)
    assert jnp.allclose(fast, out, atol=0.0, rtol=0.0), "fast path mismatch"

    print("KERNEL_OK")
</pallas_src>

<mosaic_0001>
module attributes {stable_mosaic.version = 11 : i64} {
  func.func @_hist_attn_kernel(%arg0: i32, %arg1: memref<8x128xf32, #tpu.memory_space<vmem>>, %arg2: memref<8x128xf32, #tpu.memory_space<vmem>>, %arg3: memref<128x128xbf16, #tpu.memory_space<vmem>>, %arg4: memref<128x128xbf16, #tpu.memory_space<vmem>>, %arg5: memref<2x128xf32, #tpu.memory_space<vmem>>, %arg6: memref<1x1xf32, #tpu.memory_space<smem>>, %arg7: memref<8x128xf32, #tpu.memory_space<vmem>>) attributes {dimension_semantics = [#tpu.dimension_semantics<parallel>], iteration_bounds = array<i64: 2>, scalar_prefetch = 0 : i64, scratch_operands = 0 : i64, tpu.core_type = #tpu.core_type<tc>, window_params = [{transform_indices = @transform_0, window_bounds = array<i64: 8, 128>}, {transform_indices = @transform_1, window_bounds = array<i64: 8, 128>}, {pipeline_mode = #tpu.pipeline_mode<synchronous>, transform_indices = @transform_2, window_bounds = array<i64: 128, 128>}, {pipeline_mode = #tpu.pipeline_mode<synchronous>, transform_indices = @transform_3, window_bounds = array<i64: 128, 128>}, {pipeline_mode = #tpu.pipeline_mode<synchronous>, transform_indices = @transform_4, window_bounds = array<i64: 2, 128>}, {transform_indices = @transform_5, window_bounds = array<i64: 1, 1>}, {transform_indices = @transform_6, window_bounds = array<i64: 8, 128>}]} {
    %c0 = arith.constant 0 : index
    %c0_0 = arith.constant 0 : index
    %0 = vector.load %arg2[%c0, %c0_0] : memref<8x128xf32, #tpu.memory_space<vmem>>, vector<8x128xf32>
    %c0_1 = arith.constant 0 : index
    %c0_2 = arith.constant 0 : index
    %1 = vector.load %arg1[%c0_1, %c0_2] : memref<8x128xf32, #tpu.memory_space<vmem>>, vector<8x128xf32>
    %2 = arith.truncf %1 : vector<8x128xf32> to vector<8x128xbf16>
    %c0_3 = arith.constant 0 : index
    %c0_4 = arith.constant 0 : index
    %3 = vector.load %arg3[%c0_3, %c0_4] : memref<128x128xbf16, #tpu.memory_space<vmem>>, vector<128x128xbf16>
    %cst = arith.constant dense<0.000000e+00> : vector<8x128xf32>
    %4 = tpu.matmul %2, %3, %cst {dimension_numbers = #tpu.dot_dimension_numbers<[1], [0], [0], [1], [0, 0, 1, 1], [], []>} : vector<8x128xbf16>, vector<128x128xbf16>, vector<8x128xf32> -> vector<8x128xf32>
    %5 = arith.truncf %0 : vector<8x128xf32> to vector<8x128xbf16>
    %c0_5 = arith.constant 0 : index
    %c0_6 = arith.constant 0 : index
    %6 = vector.load %arg4[%c0_5, %c0_6] : memref<128x128xbf16, #tpu.memory_space<vmem>>, vector<128x128xbf16>
    %cst_7 = arith.constant dense<0.000000e+00> : vector<8x128xf32>
    %7 = tpu.matmul %5, %6, %cst_7 {dimension_numbers = #tpu.dot_dimension_numbers<[1], [0], [0], [1], [0, 0, 1, 1], [], []>} : vector<8x128xbf16>, vector<128x128xbf16>, vector<8x128xf32> -> vector<8x128xf32>
    %8 = arith.addf %4, %7 : vector<8x128xf32>
    %c0_8 = arith.constant 0 : index
    %c0_9 = arith.constant 0 : index
    %9 = vector.load %arg5[%c0_8, %c0_9] : memref<2x128xf32, #tpu.memory_space<vmem>>, vector<1x128xf32>
    %10 = vector.broadcast %9 : vector<1x128xf32> to vector<8x128xf32>
    %11 = arith.addf %8, %10 : vector<8x128xf32>
    %12 = math.tanh %11 : vector<8x128xf32>
    %c1 = arith.constant 1 : index
    %c0_10 = arith.constant 0 : index
    %13 = vector.load %arg5[%c1, %c0_10] : memref<2x128xf32, #tpu.memory_space<vmem>>, vector<1x128xf32>
    %14 = vector.broadcast %13 : vector<1x128xf32> to vector<8x128xf32>
    %15 = arith.mulf %12, %14 : vector<8x128xf32>
    %cst_11 = arith.constant dense<0.000000e+00> : vector<8xf32>
    %16 = vector.multi_reduction <add>, %15, %cst_11 [1] : vector<8x128xf32> to vector<8xf32>
    %17 = vector.shape_cast %16 : vector<8xf32> to vector<8x1xf32>
    %c0_12 = arith.constant 0 : index
    %c0_13 = arith.constant 0 : index
    %18 = memref.load %arg6[%c0_12, %c0_13] : memref<1x1xf32, #tpu.memory_space<smem>>
    %19 = vector.broadcast %18 : f32 to vector<8x1xf32>
    %20 = arith.addf %17, %19 : vector<8x1xf32>
    %21 = arith.subf %20, %20 : vector<8x1xf32>
    %22 = math.exp %21 : vector<8x1xf32>
    %23 = vector.broadcast %22 : vector<8x1xf32> to vector<8x128xf32>
    %24 = arith.mulf %23, %0 : vector<8x128xf32>
    %c0_14 = arith.constant 0 : index
    %c0_15 = arith.constant 0 : index
    %25 = vector.load %arg7[%c0_14, %c0_15] : memref<8x128xf32, #tpu.memory_space<vmem>>, vector<8x128xf32>
    tpu.vector_store %arg7[%c0_14, %c0_15], %24 {strides = array<i32>} : memref<8x128xf32, #tpu.memory_space<vmem>>, vector<8x128xf32>,
    return
  }
  func.func @transform_0(%arg0: i32) -> (i32, i32) {
    %c0_i32 = arith.constant 0 : i32
    %c0_i32_0 = arith.constant 0 : i32
    return %arg0, %c0_i32 : i32, i32
  }
  func.func @transform_1(%arg0: i32) -> (i32, i32) {
    %c0_i32 = arith.constant 0 : i32
    %c0_i32_0 = arith.constant 0 : i32
    return %arg0, %c0_i32 : i32, i32
  }
  func.func @transform_2(%arg0: i32) -> (i32, i32) {
    %c0_i32 = arith.constant 0 : i32
    %c0_i32_0 = arith.constant 0 : i32
    %c0_i32_1 = arith.constant 0 : i32
    return %c0_i32, %c0_i32_0 : i32, i32
  }
  func.func @transform_3(%arg0: i32) -> (i32, i32) {
    %c0_i32 = arith.constant 0 : i32
    %c0_i32_0 = arith.constant 0 : i32
    %c0_i32_1 = arith.constant 0 : i32
    return %c0_i32, %c0_i32_0 : i32, i32
  }
  func.func @transform_4(%arg0: i32) -> (i32, i32) {
    %c0_i32 = arith.constant 0 : i32
    %c0_i32_0 = arith.constant 0 : i32
    %c0_i32_1 = arith.constant 0 : i32
    return %c0_i32, %c0_i32_0 : i32, i32
  }
  func.func @transform_5(%arg0: i32) -> (i32, i32) {
    %c0_i32 = arith.constant 0 : i32
    %c0_i32_0 = arith.constant 0 : i32
    %c0_i32_1 = arith.constant 0 : i32
    return %c0_i32, %c0_i32_0 : i32, i32
  }
  func.func @transform_6(%arg0: i32) -> (i32, i32) {
    %c0_i32 = arith.constant 0 : i32
    %c0_i32_0 = arith.constant 0 : i32
    return %arg0, %c0_i32 : i32, i32
  }
}

</mosaic_0001>

<llo_original>
// kernel: tpu_custom_call.1
$region0: #{tpu_custom_call.1}
  #allocation0 [shape = 'u32[]', space=smem, size = 0x4, offset = 0x4, fixed_abs, tag = 'smem constant byte address 0x4 - core index']
  #allocation1 [shape = 'u32[144,128]{1,0:T(1,128)}', space=vmem, size = 0x12000, scoped, tag = 'internal scratch']
  #allocation2 [shape = 'f32[1,1]{1,0:T(1,128)S(6)}', space=smem, size = 0x200, scoped, tag = 'scoped memory for tpu_custom_call.1']
  %s0 = inlined_call_operand.hbm [shape: f32[16,128], index: 0, kind: input, shape index: {}]
  %s1 = inlined_call_operand.hbm [shape: f32[16,128], index: 1, kind: input, shape index: {}]
  %s2 = inlined_call_operand.hbm [shape: bf16[128,128], index: 2, kind: input, shape index: {}]
  %s3 = inlined_call_operand.hbm [shape: bf16[128,128], index: 3, kind: input, shape index: {}]
  %s4 = inlined_call_operand.vmem [shape: f32[2,128], index: 4, kind: input, shape index: {}]
  %s5 = inlined_call_operand.<no memory space> [shape: f32[1,1], index: 5, kind: input, shape index: {}]
  %s6 = inlined_call_operand.hbm [shape: f32[16,128], index: 6, kind: output, shape index: {}]
  %s7 = sld [smem:[#allocation0]]
  $region73: #{tpu_custom_call.1} parent=0
    _
  %s9 = ssub.s32 1, %s7
  %s10 = scalar_select 0, %s9, %s7
  %11 = sst [smem:[#allocation2]] %s5
  $region1: #{tpu_custom_call.1} parent=0
    #allocation3 [shape = 'u8[8192]{0}', space=vmem, size = 0x2000, scoped, tag = 'input window, operand 0']
    #allocation4 [shape = 's32[2]{0}', space=sflag, size = 0x8, scoped, tag = 'scoped memory for tpu_custom_call.1']
    #allocation5 [shape = 's32[2]{0}', space=sflag, size = 0x8, scoped, tag = 'scoped memory for tpu_custom_call.1']
    #allocation6 [shape = 'u8[8192]{0}', space=vmem, size = 0x2000, scoped, tag = 'input window, operand 1']
    #allocation7 [shape = 's32[2]{0}', space=sflag, size = 0x8, scoped, tag = 'scoped memory for tpu_custom_call.1']
    #allocation8 [shape = 'u8[32768]{0}', space=vmem, size = 0x8000, scoped, tag = 'input window, operand 2, single buffered']
    #allocation9 [shape = 'u8[32768]{0}', space=vmem, size = 0x8000, scoped, tag = 'input window, operand 3, single buffered']
    #allocation10 [shape = 's32[1]{0}', space=sflag, size = 0x4, scoped, tag = 'scoped memory for tpu_custom_call.1']
    #allocation11 [shape = 'u8[8192]{0}', space=vmem, size = 0x2000, scoped, tag = 'output window, operand 0']
    %12 = vsyncpa [#allocation4], 0
    %s13 = scalar_lea.sflag [#allocation4], 1
    %14 = vsyncpa %s13, 0
    %15 = vsyncpa [#allocation7], 0
    %s16 = scalar_lea.sflag [#allocation7], 1
    %17 = vsyncpa %s16, 0
    %18 = vsyncpa [#allocation10], 0
    %19 = vsyncpa [#allocation5], 0
    %s20 = scalar_lea.sflag [#allocation5], 1
    %21 = vsyncpa %s20, 0
    loop: start=0, step=1, limit=4
    $region2: #{tpu_custom_call.1} parent=1 // loop_pre_header
      _
    $region3: #{tpu_custom_call.1} parent=1 // loop_header
      %s23 = sphi 0, %s27
      %p24 = scmp.ge.s32.totalorder %s23, 4
      %s33 = sphi 0, %s35
      %s36 = sphi 0, %s33
      %s37 = sphi 0, %s36
      %s53 = sphi 0, %s37
      %s59 = sphi 0, %s61
      %s62 = sphi 0, %s59
      %s63 = sphi 0, %s62
      %s79 = sphi 0, %s63
      %s83 = sphi 0, %s83
      %s85 = sphi 0, %s83
      %s86 = sphi 0, %s85
      %s100 = sphi 0, %s86
      %s104 = sphi 0, %s104
      %s106 = sphi 0, %s104
      %s107 = sphi 0, %s106
      %s121 = sphi 0, %s107
      %s125 = sphi 0, %s125
      %s127 = sphi 0, %s125
      %s128 = sphi 0, %s127
      %s142 = sphi 0, %s128
      %s146 = sphi 0, %s146
      %s148 = sphi 0, %s146
      %s149 = sphi 0, %s148
      %s163 = sphi 0, %s149
      %s169 = sphi 0, %s171
      %s172 = sphi 0, %s169
      %s173 = sphi 0, %s172
      %s189 = sphi 0, %s173
    $region4: #{tpu_custom_call.1} parent=1 // loop_header_branch
      %26 = sbr.rel (%p24) target = $region8
    $region5: #{tpu_custom_call.1} parent=1 // loop_body
      %s28 = ssub.s32 %s23, 1
      %s29 = ssub.s32 %s23, 2
      %s30 = sadd.s32 %s23, 1
      %s31 = ssub.s32 %s23, %s30
      %p32 = scmp.eq.s32.totalorder %s31, 0
      %s34 = sadd.s32 %s33, 1
      %s35 = scalar_select %p32, %s33, %s34
      %p38 = pneg %p32
      %p39 = scmp.eq.s32.totalorder %s23, 1
      %p40 = por %p38, %p39
      %p41 = scmp.ne.s32.totalorder %s33, %s36
      %p42 = scmp.eq.s32.totalorder %s23, 0
      %p43 = por %p41, %p42
      %p44 = scmp.ne.s32.totalorder %s33, %s36
      %p45 = scmp.eq.s32.totalorder %s28, 1
      %p46 = por %p44, %p45
      %p47 = scmp.ne.s32.totalorder %s36, %s37
      %p48 = scmp.eq.s32.totalorder %s28, 0
      %p49 = por %p47, %p48
      %p50 = scmp.ne.s32.totalorder %s36, %s37
      %p51 = scmp.eq.s32.totalorder %s29, 1
      %p52 = por %p50, %p51
      %p54 = scmp.ne.s32.totalorder %s37, %s53
      %p55 = scmp.eq.s32.totalorder %s29, 0
      %p56 = por %p54, %p55
      %s57 = ssub.s32 %s23, %s30
      %p58 = scmp.eq.s32.totalorder %s57, 0
      %s60 = sadd.s32 %s59, 1
      %s61 = scalar_select %p58, %s59, %s60
      %p64 = pneg %p58
      %p65 = scmp.eq.s32.totalorder %s23, 1
      %p66 = por %p64, %p65
      %p67 = scmp.ne.s32.totalorder %s59, %s62
      %p68 = scmp.eq.s32.totalorder %s23, 0
      %p69 = por %p67, %p68
      %p70 = scmp.ne.s32.totalorder %s59, %s62
      %p71 = scmp.eq.s32.totalorder %s28, 1
      %p72 = por %p70, %p71
      %p73 = scmp.ne.s32.totalorder %s62, %s63
      %p74 = scmp.eq.s32.totalorder %s28, 0
      %p75 = por %p73, %p74
      %p76 = scmp.ne.s32.totalorder %s62, %s63
      %p77 = scmp.eq.s32.totalorder %s29, 1
      %p78 = por %p76, %p77
      %p80 = scmp.ne.s32.totalorder %s63, %s79
      %p81 = scmp.eq.s32.totalorder %s29, 0
      %p82 = por %p80, %p81
      %s84 = sadd.s32 %s83, 1
      %p87 = scmp.eq.s32.totalorder %s23, 1
      %p88 = scmp.ne.s32.totalorder %s83, %s85
      %p89 = scmp.eq.s32.totalorder %s23, 0
      %p90 = por %p88, %p89
      %p91 = scmp.ne.s32.totalorder %s83, %s85
      %p92 = scmp.eq.s32.totalorder %s28, 1
      %p93 = por %p91, %p92
      %p94 = scmp.ne.s32.totalorder %s85, %s86
      %p95 = scmp.eq.s32.totalorder %s28, 0
      %p96 = por %p94, %p95
      %p97 = scmp.ne.s32.totalorder %s85, %s86
      %p98 = scmp.eq.s32.totalorder %s29, 1
      %p99 = por %p97, %p98
      %p101 = scmp.ne.s32.totalorder %s86, %s100
      %p102 = scmp.eq.s32.totalorder %s29, 0
      %p103 = por %p101, %p102
      %s105 = sadd.s32 %s104, 1
      %p108 = scmp.eq.s32.totalorder %s23, 1
      %p109 = scmp.ne.s32.totalorder %s104, %s106
      %p110 = scmp.eq.s32.totalorder %s23, 0
      %p111 = por %p109, %p110
      %p112 = scmp.ne.s32.totalorder %s104, %s106
      %p113 = scmp.eq.s32.totalorder %s28, 1
      %p114 = por %p112, %p113
      %p115 = scmp.ne.s32.totalorder %s106, %s107
      %p116 = scmp.eq.s32.totalorder %s28, 0
      %p117 = por %p115, %p116
      %p118 = scmp.ne.s32.totalorder %s106, %s107
      %p119 = scmp.eq.s32.totalorder %s29, 1
      %p120 = por %p118, %p119
      %p122 = scmp.ne.s32.totalorder %s107, %s121
      %p123 = scmp.eq.s32.totalorder %s29, 0
      %p124 = por %p122, %p123
      %s126 = sadd.s32 %s125, 1
      %p129 = scmp.eq.s32.totalorder %s23, 1
      %p130 = scmp.ne.s32.totalorder %s125, %s127
      %p131 = scmp.eq.s32.totalorder %s23, 0
      %p132 = por %p130, %p131
      %p133 = scmp.ne.s32.totalorder %s125, %s127
      %p134 = scmp.eq.s32.totalorder %s28, 1
      %p135 = por %p133, %p134
      %p136 = scmp.ne.s32.totalorder %s127, %s128
      %p137 = scmp.eq.s32.totalorder %s28, 0
      %p138 = por %p136, %p137
      %p139 = scmp.ne.s32.totalorder %s127, %s128
      %p140 = scmp.eq.s32.totalorder %s29, 1
      %p141 = por %p139, %p140
      %p143 = scmp.ne.s32.totalorder %s128, %s142
      %p144 = scmp.eq.s32.totalorder %s29, 0
      %p145 = por %p143, %p144
      %s147 = sadd.s32 %s146, 1
      %p150 = scmp.eq.s32.totalorder %s23, 1
      %p151 = scmp.ne.s32.totalorder %s146, %s148
      %p152 = scmp.eq.s32.totalorder %s23, 0
      %p153 = por %p151, %p152
      %p154 = scmp.ne.s32.totalorder %s146, %s148
      %p155 = scmp.eq.s32.totalorder %s28, 1
      %p156 = por %p154, %p155
      %p157 = scmp.ne.s32.totalorder %s148, %s149
      %p158 = scmp.eq.s32.totalorder %s28, 0
      %p159 = por %p157, %p158
      %p160 = scmp.ne.s32.totalorder %s148, %s149
      %p161 = scmp.eq.s32.totalorder %s29, 1
      %p162 = por %p160, %p161
      %p164 = scmp.ne.s32.totalorder %s149, %s163
      %p165 = scmp.eq.s32.totalorder %s29, 0
      %p166 = por %p164, %p165
      %s167 = ssub.s32 %s23, %s30
      %p168 = scmp.eq.s32.totalorder %s167, 0
      %s170 = sadd.s32 %s169, 1
      %s171 = scalar_select %p168, %s169, %s170
      %p174 = pneg %p168
      %p175 = scmp.eq.s32.totalorder %s23, 1
      %p176 = por %p174, %p175
      %p177 = scmp.ne.s32.totalorder %s169, %s172
      %p178 = scmp.eq.s32.totalorder %s23, 0
      %p179 = por %p177, %p178
      %p180 = scmp.ne.s32.totalorder %s169, %s172
      %p181 = scmp.eq.s32.totalorder %s28, 1
      %p182 = por %p180, %p181
      %p183 = scmp.ne.s32.totalorder %s172, %s173
      %p184 = scmp.eq.s32.totalorder %s28, 0
      %p185 = por %p183, %p184
      %p186 = scmp.ne.s32.totalorder %s172, %s173
      %p187 = scmp.eq.s32.totalorder %s29, 1
      %p188 = por %p186, %p187
      %p190 = scmp.ne.s32.totalorder %s173, %s189
      %p191 = scmp.eq.s32.totalorder %s29, 0
      %p192 = por %p190, %p191
      %p193 = scmp.le.s32.totalorder 1, %s23
      %p194 = scmp.lt.s32.totalorder %s23, 3
      %p195 = pnand %p193, %p194
      %p196 = pneg %p195
      // Predicated region
      $region9: #{tpu_custom_call.1} parent=5 // pred_check
        _
      $region10: #{tpu_custom_call.1} parent=5 // pred_check_branch
        %198 = sbr.rel (%p195) target = $region12
      $region11: #{tpu_custom_call.1} parent=5 // pred_region
        %s199 = ssub.s32 %s23, 1
        // Predicated region
        $region13: #{tpu_custom_call.1} parent=11 // pred_check
          %p200 = pneg %p96
        $region14: #{tpu_custom_call.1} parent=11 // pred_check_branch
          %202 = sbr.rel (%p200) target = $region16
        $region15: #{tpu_custom_call.1} parent=11 // pred_region
          %s204 = ssub.s32 1024, 1024
          %205 = vsyncadd [#allocation7], %s204
          %s206 = sshll.u32 [#allocation8], 4
          %s207 = int_to_ptr.vmem [resolvable:$true] %s206
          %212 = dma.hbm_to_vmem [thread:$0]  %s2, 1024, %s207, [#allocation7], 64, 64, 4
        $region16: #{tpu_custom_call.1} parent=11 // pred_fallthru
          _
        // Predicated region
        $region17: #{tpu_custom_call.1} parent=11 // pred_check
          %p213 = pneg %p117
        $region18: #{tpu_custom_call.1} parent=11 // pred_check_branch
          %215 = sbr.rel (%p213) target = $region20
        $region19: #{tpu_custom_call.1} parent=11 // pred_region
          %s217 = ssub.s32 1024, 1024
          %218 = vsyncadd [#allocation10], %s217
          %s219 = sshll.u32 [#allocation9], 4
          %s220 = int_to_ptr.vmem [resolvable:$true] %s219
          %225 = dma.hbm_to_vmem [thread:$0]  %s3, 1024, %s220, [#allocation10], 64, 64, 4
        $region20: #{tpu_custom_call.1} parent=11 // pred_fallthru
          _
        // Predicated region
        $region21: #{tpu_custom_call.1} parent=11 // pred_check
          %p226 = pneg %p138
        $region22: #{tpu_custom_call.1} parent=11 // pred_check_branch
          %228 = sbr.rel (%p226) target = $region24
        $region23: #{tpu_custom_call.1} parent=11 // pred_region
          _
        $region24: #{tpu_custom_call.1} parent=11 // pred_fallthru
          _
        // Predicated region
        $region25: #{tpu_custom_call.1} parent=11 // pred_check
          %p229 = pneg %p159
        $region26: #{tpu_custom_call.1} parent=11 // pred_check_branch
          %231 = sbr.rel (%p229) target = $region28
        $region27: #{tpu_custom_call.1} parent=11 // pred_region
          _
        $region28: #{tpu_custom_call.1} parent=11 // pred_fallthru
          _
      $region12: #{tpu_custom_call.1} parent=5 // pred_fallthru
        _
      %p232 = scmp.lt.s32.totalorder %s23, 2
      // Predicated region
      $region29: #{tpu_custom_call.1} parent=5 // pred_check
        %p233 = pneg %p232
      $region30: #{tpu_custom_call.1} parent=5 // pred_check_branch
        %235 = sbr.rel (%p233) target = $region32
      $region31: #{tpu_custom_call.1} parent=5 // pred_region
        // Predicated region
        $region33: #{tpu_custom_call.1} parent=31 // pred_check
          %p236 = pneg %p43
        $region34: #{tpu_custom_call.1} parent=31 // pred_check_branch
          %238 = sbr.rel (%p236) target = $region36
        $region35: #{tpu_custom_call.1} parent=31 // pred_region
          %s239 = sand.u32 %s33, 1
          %s240 = scalar_lea.sflag [#allocation4], %s239
          %s241 = sand.u32 %s33, 1
          %s242 = smul.addr %s241, 8
          %s243 = scalar_lea.vmem [#allocation3], %s242
          %s245 = ssub.s32 128, 128
          %246 = vsyncadd %s240, %s245
          %s247 = smul.addr %s23, 128
          %s248 = scalar_lea.hbm %s0, %s247
          %s250 = sshll.u32 %s243, 4
          %s251 = int_to_ptr.vmem [resolvable:$true] %s250
          %253 = dma.hbm_to_vmem [thread:$0]  %s248, 128, %s251, %s240
        $region36: #{tpu_custom_call.1} parent=31 // pred_fallthru
          _
        // Predicated region
        $region37: #{tpu_custom_call.1} parent=31 // pred_check
          %p254 = pneg %p69
        $region38: #{tpu_custom_call.1} parent=31 // pred_check_branch
          %256 = sbr.rel (%p254) target = $region40
        $region39: #{tpu_custom_call.1} parent=31 // pred_region
          %s257 = sand.u32 %s23, 1
          %s258 = scalar_lea.sflag [#allocation7], %s257
          %s259 = sand.u32 %s59, 1
          %s260 = smul.addr %s259, 8
          %s261 = scalar_lea.vmem [#allocation6], %s260
          %s263 = ssub.s32 128, 128
          %264 = vsyncadd %s258, %s263
          %s265 = smul.addr %s23, 128
          %s266 = scalar_lea.hbm %s1, %s265
          %s268 = sshll.u32 %s261, 4
          %s269 = int_to_ptr.vmem [resolvable:$true] %s268
          %271 = dma.hbm_to_vmem [thread:$0]  %s266, 128, %s269, %s258
        $region40: #{tpu_custom_call.1} parent=31 // pred_fallthru
          _
      $region32: #{tpu_custom_call.1} parent=5 // pred_fallthru
        _
      %p272 = scmp.le.s32.totalorder 1, %s23
      %p273 = scmp.lt.s32.totalorder %s23, 3
      %p274 = pnand %p272, %p273
      %p275 = pneg %p274
      // Predicated region
      $region41: #{tpu_custom_call.1} parent=5 // pred_check
        _
      $region42: #{tpu_custom_call.1} parent=5 // pred_check_branch
        %277 = sbr.rel (%p274) target = $region44
      $region43: #{tpu_custom_call.1} parent=5 // pred_region
        %s278 = ssub.s32 %s23, 1
        %s279 = sand.u32 %s36, 1
        %s280 = scalar_lea.sflag [#allocation4], %s279
        %s281 = sand.u32 %s36, 1
        %s282 = smul.addr %s281, 8
        %s283 = scalar_lea.vmem [#allocation3], %s282
        // Predicated region
        $region45: #{tpu_custom_call.1} parent=43 // pred_check
          %p284 = pneg %p49
        $region46: #{tpu_custom_call.1} parent=43 // pred_check_branch
          %286 = sbr.rel (%p284) target = $region48
        $region47: #{tpu_custom_call.1} parent=43 // pred_region
          %287 = dma.done %s280, 128
        $region48: #{tpu_custom_call.1} parent=43 // pred_fallthru
          _
        %s288 = sand.u32 %s28, 1
        %s289 = scalar_lea.sflag [#allocation7], %s288
        %s290 = sand.u32 %s62, 1
        %s291 = smul.addr %s290, 8
        %s292 = scalar_lea.vmem [#allocation6], %s291
        // Predicated region
        $region49: #{tpu_custom_call.1} parent=43 // pred_check
          %p293 = pneg %p75
        $region50: #{tpu_custom_call.1} parent=43 // pred_check_branch
          %295 = sbr.rel (%p293) target = $region52
        $region51: #{tpu_custom_call.1} parent=43 // pred_region
          %296 = dma.done %s289, 128
        $region52: #{tpu_custom_call.1} parent=43 // pred_fallthru
          _
        // Predicated region
        $region53: #{tpu_custom_call.1} parent=43 // pred_check
          %p297 = pneg %p96
        $region54: #{tpu_custom_call.1} parent=43 // pred_check_branch
          %299 = sbr.rel (%p297) target = $region56
        $region55: #{tpu_custom_call.1} parent=43 // pred_region
          %300 = dma.done [#allocation7], 1024
        $region56: #{tpu_custom_call.1} parent=43 // pred_fallthru
          _
        // Predicated region
        $region57: #{tpu_custom_call.1} parent=43 // pred_check
          %p301 = pneg %p117
        $region58: #{tpu_custom_call.1} parent=43 // pred_check_branch
          %303 = sbr.rel (%p301) target = $region60
        $region59: #{tpu_custom_call.1} parent=43 // pred_region
          %304 = dma.done [#allocation10], 1024
        $region60: #{tpu_custom_call.1} parent=43 // pred_fallthru
          _
        %s305 = sand.u32 %s36, 1
        %s306 = scalar_lea.sflag [#allocation4], %s305
        %s307 = sand.u32 %s36, 1
        %s308 = smul.addr %s307, 8
        %s309 = scalar_lea.vmem [#allocation3], %s308
        %p310 = pneg %p49
        %p311 = pneg %p46
        %s312 = sand.u32 %s28, 1
        %s313 = scalar_lea.sflag [#allocation7], %s312
        %s314 = sand.u32 %s62, 1
        %s315 = smul.addr %s314, 8
        %s316 = scalar_lea.vmem [#allocation6], %s315
        %p317 = pneg %p75
        %p318 = pneg %p72
        %p319 = pneg %p96
        %p320 = pneg %p93
        %p321 = pneg %p117
        %p322 = pneg %p114
        %p323 = pneg %p138
        %p324 = pneg %p135
        %p325 = pneg %p159
        %p326 = pneg %p156
        %p327 = pneg %p185
        %p328 = pneg %p182
        %s329 = sand.u32 %s172, 1
        %s330 = scalar_lea.sflag [#allocation5], %s329
        %s331 = sand.u32 %s172, 1
        %s332 = smul.addr %s331, 8
        %s333 = scalar_lea.vmem [#allocation11], %s332
        %v335 = vld [vmem:[%s292] sm:$0xff]
        %v336 = vld [vmem:[%s283] sm:$0xff]
        %v337 = vpack.c.bf16 %v336, %v336
        %v338 = vld [vmem:[#allocation8] sm:$0xf]
        %v339 = vld [vmem:[#allocation8 + $0x4] sm:$0xf]
        %v340 = vld [vmem:[#allocation8 + $0x8] sm:$0xf]
        %v341 = vld [vmem:[#allocation8 + $0xc] sm:$0xf]
        %v342 = vld [vmem:[#allocation8 + $0x10] sm:$0xf]
        %v343 = vld [vmem:[#allocation8 + $0x14] sm:$0xf]
        %v344 = vld [vmem:[#allocation8 + $0x18] sm:$0xf]
        %v345 = vld [vmem:[#allocation8 + $0x1c] sm:$0xf]
        %v346 = vld [vmem:[#allocation8 + $0x20] sm:$0xf]
        %v347 = vld [vmem:[#allocation8 + $0x24] sm:$0xf]
        %v348 = vld [vmem:[#allocation8 + $0x28] sm:$0xf]
        %v349 = vld [vmem:[#allocation8 + $0x2c] sm:$0xf]
        %v350 = vld [vmem:[#allocation8 + $0x30] sm:$0xf]
        %v351 = vld [vmem:[#allocation8 + $0x34] sm:$0xf]
        %v352 = vld [vmem:[#allocation8 + $0x38] sm:$0xf]
        %v353 = vld [vmem:[#allocation8 + $0x3c] sm:$0xf]
        %v354 = vpack.c.bf16 %v335, %v335
        %v355 = vld [vmem:[#allocation9] sm:$0xf]
        %v356 = vld [vmem:[#allocation9 + $0x4] sm:$0xf]
        %v357 = vld [vmem:[#allocation9 + $0x8] sm:$0xf]
        %v358 = vld [vmem:[#allocation9 + $0xc] sm:$0xf]
        %v359 = vld [vmem:[#allocation9 + $0x10] sm:$0xf]
        %v360 = vld [vmem:[#allocation9 + $0x14] sm:$0xf]
        %v361 = vld [vmem:[#allocation9 + $0x18] sm:$0xf]
        %v362 = vld [vmem:[#allocation9 + $0x1c] sm:$0xf]
        %v363 = vld [vmem:[#allocation9 + $0x20] sm:$0xf]
        %v364 = vld [vmem:[#allocation9 + $0x24] sm:$0xf]
        %v365 = vld [vmem:[#allocation9 + $0x28] sm:$0xf]
        %v366 = vld [vmem:[#allocation9 + $0x2c] sm:$0xf]
        %v367 = vld [vmem:[#allocation9 + $0x30] sm:$0xf]
        %v368 = vld [vmem:[#allocation9 + $0x34] sm:$0xf]
        %v369 = vld [vmem:[#allocation9 + $0x38] sm:$0xf]
        %v370 = vld [vmem:[#allocation9 + $0x3c] sm:$0xf]
        %v387 = vunpack.c.l.b16 %v355
        %v388 = vunpack.c.l.b16 %v356
        %v389 = vunpack.c.l.b16 %v357
        %v390 = vunpack.c.l.b16 %v358
        %v391 = vunpack.c.l.b16 %v359
        %v392 = vunpack.c.l.b16 %v360
        %v393 = vunpack.c.l.b16 %v361
        %v394 = vunpack.c.l.b16 %v362
        %v395 = vunpack.c.l.b16 %v363
        %v396 = vunpack.c.l.b16 %v364
        %v397 = vunpack.c.l.b16 %v365
        %v398 = vunpack.c.l.b16 %v366
        %v399 = vunpack.c.l.b16 %v367
        %v400 = vunpack.c.l.b16 %v368
        %v401 = vunpack.c.l.b16 %v369
        %v402 = vunpack.c.l.b16 %v370
        %v403 = vpack.c.b16 %v388, %v387
        %v404 = vpack.c.b16 %v390, %v389
        %v405 = vpack.c.b16 %v392, %v391
        %v406 = vpack.c.b16 %v394, %v393
        %v407 = vpack.c.b16 %v396, %v395
        %v408 = vpack.c.b16 %v398, %v397
        %v409 = vpack.c.b16 %v400, %v399
        %v410 = vpack.c.b16 %v402, %v401
        %419 = vmatprep.subr.bf16.mxu0 0
        %420 = vmatpush1.bf16.msra.mxu0 %v403
        %421 = vmatprep.subr.bf16.mxu0 0
        %422 = vmatpush1.bf16.msra.mxu0 %v404
        %423 = vmatprep.subr.bf16.mxu0 0
        %424 = vmatpush1.bf16.msra.mxu0 %v405
        %425 = vmatprep.subr.bf16.mxu0 0
        %426 = vmatpush1.bf16.msra.mxu0 %v406
        %427 = vmatprep.subr.bf16.mxu0 0
        %428 = vmatpush1.bf16.msra.mxu0 %v407
        %429 = vmatprep.subr.bf16.mxu0 0
        %430 = vmatpush1.bf16.msra.mxu0 %v408
        %431 = vmatprep.subr.bf16.mxu0 0
        %432 = vmatpush1.bf16.msra.mxu0 %v409
        %433 = vmatprep.subr.bf16.mxu0 0
        %434 = vmatpush1.bf16.msra.mxu0 %v410
        %435 = vmatprep.subr.bf16.mxu0 0
        %436 = vmatpush1.bf16.msra.mxu0 0
        %437 = vmatprep.subr.bf16.mxu0 0
        %438 = vmatpush1.bf16.msra.mxu0 0
        %439 = vmatprep.subr.bf16.mxu0 0
        %440 = vmatpush1.bf16.msra.mxu0 0
        %441 = vmatprep.subr.bf16.mxu0 0
        %442 = vmatpush1.bf16.msra.mxu0 0
        %443 = vmatprep.subr.bf16.mxu0 0
        %444 = vmatpush1.bf16.msra.mxu0 0
        %445 = vmatprep.subr.bf16.mxu0 0
        %446 = vmatpush1.bf16.msra.mxu0 0
        %447 = vmatprep.subr.bf16.mxu0 0
        %448 = vmatpush1.bf16.msra.mxu0 0
        %449 = vmatprep.subr.bf16.mxu0 0
        %450 = vmatpush1.bf16.msra.mxu0 0
        %451 = vmatprep.mubr.bf16.mxu0 0
        %452 = vmatmul.mubr.bf16.gmra.mrb[0].mxu0 %v354
        %v453 = vpop.f32.mrb[0].mxu0
        %v454 = vadd.f32 0.0, %v453
        %v455 = vpop.f32.mrb[0].mxu0
        %v456 = vpop.f32.mrb[0].mxu0
        %v457 = vpop.f32.mrb[0].mxu0
        %458 = vdwg.mxu0
        %v475 = vunpack.c.l.b16 %v338
        %v476 = vunpack.c.l.b16 %v339
        %v477 = vunpack.c.l.b16 %v340
        %v478 = vunpack.c.l.b16 %v341
        %v479 = vunpack.c.l.b16 %v342
        %v480 = vunpack.c.l.b16 %v343
        %v481 = vunpack.c.l.b16 %v344
        %v482 = vunpack.c.l.b16 %v345
        %v483 = vunpack.c.l.b16 %v346
        %v484 = vunpack.c.l.b16 %v347
        %v485 = vunpack.c.l.b16 %v348
        %v486 = vunpack.c.l.b16 %v349
        %v487 = vunpack.c.l.b16 %v350
        %v488 = vunpack.c.l.b16 %v351
        %v489 = vunpack.c.l.b16 %v352
        %v490 = vunpack.c.l.b16 %v353
        %v491 = vpack.c.b16 %v476, %v475
        %v492 = vpack.c.b16 %v478, %v477
        %v493 = vpack.c.b16 %v480, %v479
        %v494 = vpack.c.b16 %v482, %v481
        %v495 = vpack.c.b16 %v484, %v483
        %v496 = vpack.c.b16 %v486, %v485
        %v497 = vpack.c.b16 %v488, %v487
        %v498 = vpack.c.b16 %v490, %v489
        %507 = vmatprep.subr.bf16.mxu0 0
        %508 = vmatpush1.bf16.msra.mxu0 %v491
        %509 = vmatprep.subr.bf16.mxu0 0
        %510 = vmatpush1.bf16.msra.mxu0 %v492
        %511 = vmatprep.subr.bf16.mxu0 0
        %512 = vmatpush1.bf16.msra.mxu0 %v493
        %513 = vmatprep.subr.bf16.mxu0 0
        %514 = vmatpush1.bf16.msra.mxu0 %v494
        %515 = vmatprep.subr.bf16.mxu0 0
        %516 = vmatpush1.bf16.msra.mxu0 %v495
        %517 = vmatprep.subr.bf16.mxu0 0
        %518 = vmatpush1.bf16.msra.mxu0 %v496
        %519 = vmatprep.subr.bf16.mxu0 0
        %520 = vmatpush1.bf16.msra.mxu0 %v497
        %521 = vmatprep.subr.bf16.mxu0 0
        %522 = vmatpush1.bf16.msra.mxu0 %v498
        %523 = vmatprep.subr.bf16.mxu0 0
        %524 = vmatpush1.bf16.msra.mxu0 0
        %525 = vmatprep.subr.bf16.mxu0 0
        %526 = vmatpush1.bf16.msra.mxu0 0
        %527 = vmatprep.subr.bf16.mxu0 0
        %528 = vmatpush1.bf16.msra.mxu0 0
        %529 = vmatprep.subr.bf16.mxu0 0
        %530 = vmatpush1.bf16.msra.mxu0 0
        %531 = vmatprep.subr.bf16.mxu0 0
        %532 = vmatpush1.bf16.msra.mxu0 0
        %533 = vmatprep.subr.bf16.mxu0 0
        %534 = vmatpush1.bf16.msra.mxu0 0
        %535 = vmatprep.subr.bf16.mxu0 0
        %536 = vmatpush1.bf16.msra.mxu0 0
        %537 = vmatprep.subr.bf16.mxu0 0
        %538 = vmatpush1.bf16.msra.mxu0 0
        %539 = vmatprep.mubr.bf16.mxu0 0
        %540 = vmatmul.mubr.bf16.gmra.mrb[0].mxu0 %v337
        %v541 = vpop.f32.mrb[0].mxu0
        %v542 = vadd.f32 %v454, %v541
        %v543 = vpop.f32.mrb[0].mxu0
        %v544 = vpop.f32.mrb[0].mxu0
        %v545 = vpop.f32.mrb[0].mxu0
        %546 = vdwg.mxu0
        %v547 = vld [vmem:[%s4] sm:$0x1]
        %v548 = vlaneseq
        %v549 = vshrl.u32 %v548, 7
        %v550 = vsub.s32 0, %v549
        %v551 = vrot.slane %v547, %v550
        %v552 = vadd.f32 %v542, %v551
        %v553 = vtanh.pop %v552
        %v554 = vld [vmem:[%s4 + $0x1] sm:$0x1]
        %v555 = vlaneseq
        %v556 = vshrl.u32 %v555, 7
        %v557 = vsub.s32 0, %v556
        %v558 = vrot.slane %v554, %v557
        %v559 = vmul.f32 %v553, %v558
        %560 = vadd.xlane.f32.xlu0 %v559
        %v561 = vpop.xlane.xlu0 %560
        %s562 = sld [smem:[#allocation2]]
        %v563 = vstv %s562
        %v564 = vadd.f32 %v561, %v563
        %v565 = vsub.f32 %v564, %v564
        %v566 = vmul.f32 %v565, 1.442695
        %v567 = vpow.pop %v566
        %v568 = vmul.f32 %v567, %v335
        %569 = vst [vmem:[%s333] sm:$0xff] %v568
        %s570 = sand.u32 %s172, 1
        %s571 = scalar_lea.sflag [#allocation5], %s570
        %s572 = sand.u32 %s172, 1
        %s573 = smul.addr %s572, 8
        %s574 = scalar_lea.vmem [#allocation11], %s573
        // Predicated region
        $region61: #{tpu_custom_call.1} parent=43 // pred_check
          %p575 = pneg %p182
        $region62: #{tpu_custom_call.1} parent=43 // pred_check_branch
          %577 = sbr.rel (%p575) target = $region64
        $region63: #{tpu_custom_call.1} parent=43 // pred_region
          %s579 = ssub.s32 128, 128
          %580 = vsyncadd %s571, %s579
          %s581 = smul.addr %s28, 128
          %s582 = scalar_lea.hbm %s6, %s581
          %s584 = sshll.u32 %s574, 4
          %s585 = int_to_ptr.vmem [resolvable:$true] %s584
          %587 = dma.vmem_to_hbm [thread:$0]  %s585, 128, %s582, %s571
        $region64: #{tpu_custom_call.1} parent=43 // pred_fallthru
          _
      $region44: #{tpu_custom_call.1} parent=5 // pred_fallthru
        _
      %p588 = scmp.le.s32.totalorder 2, %s23
      // Predicated region
      $region65: #{tpu_custom_call.1} parent=5 // pred_check
        %p589 = pneg %p588
      $region66: #{tpu_custom_call.1} parent=5 // pred_check_branch
        %591 = sbr.rel (%p589) target = $region68
      $region67: #{tpu_custom_call.1} parent=5 // pred_region
        %s592 = ssub.s32 %s23, 2
        // Predicated region
        $region69: #{tpu_custom_call.1} parent=67 // pred_check
          %p593 = pneg %p188
        $region70: #{tpu_custom_call.1} parent=67 // pred_check_branch
          %595 = sbr.rel (%p593) target = $region72
        $region71: #{tpu_custom_call.1} parent=67 // pred_region
          %s596 = sand.u32 %s173, 1
          %s597 = scalar_lea.sflag [#allocation5], %s596
          %s598 = sand.u32 %s173, 1
          %s599 = smul.addr %s598, 8
          %s600 = scalar_lea.vmem [#allocation11], %s599
          %601 = dma.done %s597, 128
        $region72: #{tpu_custom_call.1} parent=67 // pred_fallthru
          _
      $region68: #{tpu_custom_call.1} parent=5 // pred_fallthru
        _
    $region6: #{tpu_custom_call.1} parent=1 // loop_footer
      %s27 = sadd.s32 1, %s23
    $region7: #{tpu_custom_call.1} parent=1 // loop_footer_branch
      %22 = sbr.rel target = $region3
    $region8: #{tpu_custom_call.1} parent=1 // loop_exit
      _
    %602 = vsyncpa [#allocation4], 1
    %s603 = scalar_lea.sflag [#allocation4], 1
    %604 = vsyncpa %s603, 1
    %605 = vsyncpa [#allocation7], 1
    %s606 = scalar_lea.sflag [#allocation7], 1
    %607 = vsyncpa %s606, 1
    %608 = vsyncpa [#allocation10], 1
    %609 = vsyncpa [#allocation5], 1
    %s610 = scalar_lea.sflag [#allocation5], 1
    %611 = vsyncpa %s610, 1

</llo_original>
